<compile_context>
chip_gen: v7x
topology: tpu7x:2x2x1
jax: 0.10.0
libtpu: 0.0.40
codegen_flags: <defaults>
</compile_context>

<pallas_src>
import jax
import jax.numpy as jnp
from jax.experimental import pallas as pl
from jax.experimental.pallas import tpu as pltpu

LANE = 128      # TPU lane width; hidden feature dims are padded to this
SUBLANE = 8     # f32 sublane width; batch tile stays a multiple of this
MAX_TB = 8192   # batch-tile cap (v7x has only 64 MiB physical VMEM)


def _round_up(x, m):
    return (x + m - 1) // m * m


def _cdiv(a, b):
    return -(-a // b)


def _pad_cols(a, n_cols):
    pad = n_cols - a.shape[1]
    return a if pad == 0 else jnp.pad(a, ((0, 0), (0, pad)))


def _pad_rows(a, n_rows):
    pad = n_rows - a.shape[0]
    return a if pad == 0 else jnp.pad(a, ((0, pad), (0, 0)))


def _mlp_kernel(x_ref,
                w1_ref, b1_ref,
                w2_ref, b2_ref,
                w3_ref, b3_ref,
                w4_ref, b4_ref,
                o_ref):
    # layer 1: (TB, D_in) @ (D_in, 128) -> f32 acc, bias+ReLU in f32
    h = jnp.dot(x_ref[...], w1_ref[...], preferred_element_type=jnp.float32)
    h = jnp.maximum(h + b1_ref[...], 0.0)
    # layer 2: (TB, 128) @ (128, 128)
    h = jnp.dot(h.astype(w2_ref.dtype), w2_ref[...],
                preferred_element_type=jnp.float32)
    h = jnp.maximum(h + b2_ref[...], 0.0)
    # layer 3: (TB, 128) @ (128, 128)
    h = jnp.dot(h.astype(w3_ref.dtype), w3_ref[...],
                preferred_element_type=jnp.float32)
    h = jnp.maximum(h + b3_ref[...], 0.0)
    # layer 4: (TB, 128) @ (128, d_out)  -> narrow store (block last dim == d_out)
    h = jnp.dot(h.astype(w4_ref.dtype), w4_ref[...],
                preferred_element_type=jnp.float32)
    o_ref[...] = (h + b4_ref[...]).astype(o_ref.dtype)


def sl_network_forward(x, params, *, block_b=2048, compute_dtype=jnp.bfloat16):
    """Fused MLP forward. x: (B, D_in) float32. params: dict of weights/biases."""
    B, d_in = x.shape
    d_out = params["w4"].shape[1]
    cdt = jnp.dtype(compute_dtype)
    wdt = cdt.itemsize

    # ---- pad hidden lane dims (64, 128, 64) to 128 (exact); w4 cols stay d_out.
    h1 = h2 = h3 = LANE
    w1 = _pad_cols(params["w1"], h1).astype(cdt)
    b1 = _pad_cols(params["b1"], h1)                       # biases stay f32
    w2 = _pad_cols(_pad_rows(params["w2"], h1), h2).astype(cdt)
    b2 = _pad_cols(params["b2"], h2)
    w3 = _pad_cols(_pad_rows(params["w3"], h2), h3).astype(cdt)
    b3 = _pad_cols(params["b3"], h3)
    w4 = _pad_rows(params["w4"], h3).astype(cdt)
    b4 = params["b4"]

    # ---- batch tiling: sublane-aligned tile; if the batch spans multiple tiles
    #      keep an even block count so v7x's two TensorCores stay balanced.
    block_b = min(block_b, MAX_TB)
    tb_target = _round_up(min(block_b, B), SUBLANE)
    num_blocks = _cdiv(B, tb_target)
    if num_blocks > 1 and num_blocks % 2:
        num_blocks += 1
    TB = _round_up(_cdiv(B, num_blocks), SUBLANE)
    B_pad = TB * num_blocks

    x_in = x.astype(cdt)
    if B_pad != B:
        x_in = jnp.pad(x_in, ((0, B_pad - B), (0, 0)))

    operands = (x_in, w1, b1, w2, b2, w3, b3, w4, b4)

    def resident(a):
        # Same block every grid step -> stays resident in VMEM.
        return pl.BlockSpec(a.shape, lambda i: (0, 0))

    flops = 2 * B_pad * (d_in * h1 + h1 * h2 + h2 * h3 + h3 * d_out)
    bytes_accessed = (B_pad * d_in * wdt                      # x stream (bf16)
                      + B_pad * d_out * 4                     # narrow f32 output
                      + wdt * (d_in * h1 + h1 * h2 + h2 * h3 + h3 * d_out)
                      + 4 * (h1 + h2 + h3 + d_out))           # biases

    # VMEM budget with lane-padded accounting: (TB, d_in) / (TB, d_out) blocks
    # occupy TB*128 lanes in VMEM regardless of their logical width.
    weights_bytes = sum(int(a.size) * a.dtype.itemsize for a in operands[1:])
    est_vmem = (2 * TB * LANE * wdt          # x double buffer
                + 2 * TB * LANE * 4          # out double buffer
                + 2 * weights_bytes          # resident weights (double-buffered)
                + 4 * TB * LANE * 4)         # in-kernel f32 activation headroom
    vmem_limit = None
    if est_vmem > 30 * (1 << 20):
        vmem_limit = min(int(est_vmem * 5 // 4), 56 * (1 << 20))  # v7x-safe cap

    out = pl.pallas_call(
        _mlp_kernel,
        out_shape=jax.ShapeDtypeStruct((B_pad, d_out), jnp.float32),
        grid_spec=pl.GridSpec(
            grid=(num_blocks,),
            in_specs=[pl.BlockSpec((TB, d_in), lambda i: (i, 0))]
                     + [resident(a) for a in operands[1:]],
            out_specs=pl.BlockSpec((TB, d_out), lambda i: (i, 0)),
        ),
        compiler_params=pltpu.CompilerParams(
            dimension_semantics=("parallel",),
            vmem_limit_bytes=vmem_limit),
        cost_estimate=pl.CostEstimate(
            flops=flops, transcendentals=0, bytes_accessed=bytes_accessed),
    )(*operands)

    return out if B_pad == B else out[:B]


def init_params(key, inputs_shape, outputs_shape):
    """Deterministic params matching the module (weights stored (in, out)).

    Reproduces the PyTorch post-init scaling: linear4.weight *= 0.1,
    linear4.bias *= 0.0.
    """
    dims = [(inputs_shape, 64), (64, 128), (128, 64), (64, outputs_shape)]
    params = {}
    keys = jax.random.split(key, 2 * len(dims))
    for i, (fan_in, fan_out) in enumerate(dims):
        bound = 1.0 / jnp.sqrt(jnp.float32(fan_in))
        w = jax.random.uniform(keys[2 * i], (fan_in, fan_out),
                               minval=-bound, maxval=bound, dtype=jnp.float32)
        b = jax.random.uniform(keys[2 * i + 1], (1, fan_out),
                               minval=-bound, maxval=bound, dtype=jnp.float32)
        if i == 3:
            w = w * 0.1
            b = b * 0.0
        params[f"w{i + 1}"] = w
        params[f"b{i + 1}"] = b
    return params


def _reference_forward(x, p):
    h = jnp.maximum(x @ p["w1"] + p["b1"], 0.0)
    h = jnp.maximum(h @ p["w2"] + p["b2"], 0.0)
    h = jnp.maximum(h @ p["w3"] + p["b3"], 0.0)
    return h @ p["w4"] + p["b4"]


if __name__ == "__main__":
    key = jax.random.PRNGKey(0)
    k_x, k_p, k_x2 = jax.random.split(key, 3)

    batch = 8
    inputs_shape = 32
    outputs_shape = 8

    x = jax.random.normal(k_x, (batch, inputs_shape), dtype=jnp.float32)
    params = init_params(k_p, inputs_shape, outputs_shape)
    ref = _reference_forward(x, params)

    # Float32 compute path: bit-tight check (single tile).
    out_f32 = jax.block_until_ready(
        sl_network_forward(x, params, compute_dtype=jnp.float32))
    assert out_f32.shape == (batch, outputs_shape)
    assert jnp.allclose(out_f32, ref, atol=1e-5, rtol=1e-5)

    # Default bf16 MXU path: looser tolerance (f32 accumulation, bf16 operands).
    out_bf16 = jax.block_until_ready(sl_network_forward(x, params))
    assert out_bf16.shape == (batch, outputs_shape)
    assert jnp.allclose(out_bf16, ref, atol=3e-2, rtol=3e-2)

    # Multi-tile path with a non-multiple batch: exercises tiling, batch
    # padding, and the even-block-count adjustment (300 rows @ block_b=128
    # -> 4 blocks of 80 rows).
    x_big = jax.random.normal(k_x2, (300, inputs_shape), dtype=jnp.float32)
    ref_big = _reference_forward(x_big, params)
    out_big = jax.block_until_ready(
        sl_network_forward(x_big, params, block_b=128))
    assert out_big.shape == (300, outputs_shape)
    assert jnp.allclose(out_big, ref_big, atol=3e-2, rtol=3e-2)

    print("KERNEL_OK")
</pallas_src>

<mosaic_0001>
module attributes {stable_mosaic.version = 11 : i64} {
  func.func @_mlp_kernel(%arg0: i32, %arg1: memref<8x32xf32, #tpu.memory_space<vmem>>, %arg2: memref<32x128xf32, #tpu.memory_space<vmem>>, %arg3: memref<1x128xf32, #tpu.memory_space<vmem>>, %arg4: memref<128x128xf32, #tpu.memory_space<vmem>>, %arg5: memref<1x128xf32, #tpu.memory_space<vmem>>, %arg6: memref<128x128xf32, #tpu.memory_space<vmem>>, %arg7: memref<1x128xf32, #tpu.memory_space<vmem>>, %arg8: memref<128x8xf32, #tpu.memory_space<vmem>>, %arg9: memref<1x8xf32, #tpu.memory_space<vmem>>, %arg10: memref<8x8xf32, #tpu.memory_space<vmem>>) attributes {dimension_semantics = [#tpu.dimension_semantics<parallel>], iteration_bounds = array<i64: 1>, scalar_prefetch = 0 : i64, scratch_operands = 0 : i64, tpu.core_type = #tpu.core_type<tc>, window_params = [{transform_indices = @transform_0, window_bounds = array<i64: 8, 32>}, {pipeline_mode = #tpu.pipeline_mode<synchronous>, transform_indices = @transform_1, window_bounds = array<i64: 32, 128>}, {pipeline_mode = #tpu.pipeline_mode<synchronous>, transform_indices = @transform_2, window_bounds = array<i64: 1, 128>}, {pipeline_mode = #tpu.pipeline_mode<synchronous>, transform_indices = @transform_3, window_bounds = array<i64: 128, 128>}, {pipeline_mode = #tpu.pipeline_mode<synchronous>, transform_indices = @transform_4, window_bounds = array<i64: 1, 128>}, {pipeline_mode = #tpu.pipeline_mode<synchronous>, transform_indices = @transform_5, window_bounds = array<i64: 128, 128>}, {pipeline_mode = #tpu.pipeline_mode<synchronous>, transform_indices = @transform_6, window_bounds = array<i64: 1, 128>}, {pipeline_mode = #tpu.pipeline_mode<synchronous>, transform_indices = @transform_7, window_bounds = array<i64: 128, 8>}, {pipeline_mode = #tpu.pipeline_mode<synchronous>, transform_indices = @transform_8, window_bounds = array<i64: 1, 8>}, {transform_indices = @transform_9, window_bounds = array<i64: 8, 8>}]} {
    %c0 = arith.constant 0 : index
    %c0_0 = arith.constant 0 : index
    %0 = vector.load %arg1[%c0, %c0_0] : memref<8x32xf32, #tpu.memory_space<vmem>>, vector<8x32xf32>
    %c0_1 = arith.constant 0 : index
    %c0_2 = arith.constant 0 : index
    %1 = vector.load %arg2[%c0_1, %c0_2] : memref<32x128xf32, #tpu.memory_space<vmem>>, vector<32x128xf32>
    %cst = arith.constant dense<0.000000e+00> : vector<8x128xf32>
    %2 = tpu.matmul %0, %1, %cst {dimension_numbers = #tpu.dot_dimension_numbers<[1], [0], [0], [1], [0, 0, 1, 1], [], []>} : vector<8x32xf32>, vector<32x128xf32>, vector<8x128xf32> -> vector<8x128xf32>
    %c0_3 = arith.constant 0 : index
    %c0_4 = arith.constant 0 : index
    %3 = vector.load %arg3[%c0_3, %c0_4] : memref<1x128xf32, #tpu.memory_space<vmem>>, vector<1x128xf32>
    %4 = vector.broadcast %3 : vector<1x128xf32> to vector<8x128xf32>
    %5 = arith.addf %2, %4 : vector<8x128xf32>
    %cst_5 = arith.constant 0.000000e+00 : f32
    %6 = vector.broadcast %cst_5 : f32 to vector<8x128xf32>
    %7 = arith.maximumf %5, %6 : vector<8x128xf32>
    %c0_6 = arith.constant 0 : index
    %c0_7 = arith.constant 0 : index
    %8 = vector.load %arg4[%c0_6, %c0_7] : memref<128x128xf32, #tpu.memory_space<vmem>>, vector<128x128xf32>
    %cst_8 = arith.constant dense<0.000000e+00> : vector<8x128xf32>
    %9 = tpu.matmul %7, %8, %cst_8 {dimension_numbers = #tpu.dot_dimension_numbers<[1], [0], [0], [1], [0, 0, 1, 1], [], []>} : vector<8x128xf32>, vector<128x128xf32>, vector<8x128xf32> -> vector<8x128xf32>
    %c0_9 = arith.constant 0 : index
    %c0_10 = arith.constant 0 : index
    %10 = vector.load %arg5[%c0_9, %c0_10] : memref<1x128xf32, #tpu.memory_space<vmem>>, vector<1x128xf32>
    %11 = vector.broadcast %10 : vector<1x128xf32> to vector<8x128xf32>
    %12 = arith.addf %9, %11 : vector<8x128xf32>
    %cst_11 = arith.constant 0.000000e+00 : f32
    %13 = vector.broadcast %cst_11 : f32 to vector<8x128xf32>
    %14 = arith.maximumf %12, %13 : vector<8x128xf32>
    %c0_12 = arith.constant 0 : index
    %c0_13 = arith.constant 0 : index
    %15 = vector.load %arg6[%c0_12, %c0_13] : memref<128x128xf32, #tpu.memory_space<vmem>>, vector<128x128xf32>
    %cst_14 = arith.constant dense<0.000000e+00> : vector<8x128xf32>
    %16 = tpu.matmul %14, %15, %cst_14 {dimension_numbers = #tpu.dot_dimension_numbers<[1], [0], [0], [1], [0, 0, 1, 1], [], []>} : vector<8x128xf32>, vector<128x128xf32>, vector<8x128xf32> -> vector<8x128xf32>
    %c0_15 = arith.constant 0 : index
    %c0_16 = arith.constant 0 : index
    %17 = vector.load %arg7[%c0_15, %c0_16] : memref<1x128xf32, #tpu.memory_space<vmem>>, vector<1x128xf32>
    %18 = vector.broadcast %17 : vector<1x128xf32> to vector<8x128xf32>
    %19 = arith.addf %16, %18 : vector<8x128xf32>
    %cst_17 = arith.constant 0.000000e+00 : f32
    %20 = vector.broadcast %cst_17 : f32 to vector<8x128xf32>
    %21 = arith.maximumf %19, %20 : vector<8x128xf32>
    %c0_18 = arith.constant 0 : index
    %c0_19 = arith.constant 0 : index
    %22 = vector.load %arg8[%c0_18, %c0_19] : memref<128x8xf32, #tpu.memory_space<vmem>>, vector<128x8xf32>
    %cst_20 = arith.constant dense<0.000000e+00> : vector<8x8xf32>
    %23 = tpu.matmul %21, %22, %cst_20 {dimension_numbers = #tpu.dot_dimension_numbers<[1], [0], [0], [1], [0, 0, 1, 1], [], []>} : vector<8x128xf32>, vector<128x8xf32>, vector<8x8xf32> -> vector<8x8xf32>
    %c0_21 = arith.constant 0 : index
    %c0_22 = arith.constant 0 : index
    %24 = vector.load %arg9[%c0_21, %c0_22] : memref<1x8xf32, #tpu.memory_space<vmem>>, vector<1x8xf32>
    %25 = vector.broadcast %24 : vector<1x8xf32> to vector<8x8xf32>
    %26 = arith.addf %23, %25 : vector<8x8xf32>
    %c0_23 = arith.constant 0 : index
    %c0_24 = arith.constant 0 : index
    %27 = vector.load %arg10[%c0_23, %c0_24] : memref<8x8xf32, #tpu.memory_space<vmem>>, vector<8x8xf32>
    tpu.vector_store %arg10[%c0_23, %c0_24], %26 {strides = array<i32>} : memref<8x8xf32, #tpu.memory_space<vmem>>, vector<8x8xf32>,
    return
  }
  func.func @transform_0(%arg0: i32) -> (i32, i32) {
    %c0_i32 = arith.constant 0 : i32
    %c0_i32_0 = arith.constant 0 : i32
    return %arg0, %c0_i32 : i32, i32
  }
  func.func @transform_1(%arg0: i32) -> (i32, i32) {
    %c0_i32 = arith.constant 0 : i32
    %c0_i32_0 = arith.constant 0 : i32
    %c0_i32_1 = arith.constant 0 : i32
    return %c0_i32, %c0_i32_0 : i32, i32
  }
  func.func @transform_2(%arg0: i32) -> (i32, i32) {
    %c0_i32 = arith.constant 0 : i32
    %c0_i32_0 = arith.constant 0 : i32
    %c0_i32_1 = arith.constant 0 : i32
    return %c0_i32, %c0_i32_0 : i32, i32
  }
  func.func @transform_3(%arg0: i32) -> (i32, i32) {
    %c0_i32 = arith.constant 0 : i32
    %c0_i32_0 = arith.constant 0 : i32
    %c0_i32_1 = arith.constant 0 : i32
    return %c0_i32, %c0_i32_0 : i32, i32
  }
  func.func @transform_4(%arg0: i32) -> (i32, i32) {
    %c0_i32 = arith.constant 0 : i32
    %c0_i32_0 = arith.constant 0 : i32
    %c0_i32_1 = arith.constant 0 : i32
    return %c0_i32, %c0_i32_0 : i32, i32
  }
  func.func @transform_5(%arg0: i32) -> (i32, i32) {
    %c0_i32 = arith.constant 0 : i32
    %c0_i32_0 = arith.constant 0 : i32
    %c0_i32_1 = arith.constant 0 : i32
    return %c0_i32, %c0_i32_0 : i32, i32
  }
  func.func @transform_6(%arg0: i32) -> (i32, i32) {
    %c0_i32 = arith.constant 0 : i32
    %c0_i32_0 = arith.constant 0 : i32
    %c0_i32_1 = arith.constant 0 : i32
    return %c0_i32, %c0_i32_0 : i32, i32
  }
  func.func @transform_7(%arg0: i32) -> (i32, i32) {
    %c0_i32 = arith.constant 0 : i32
    %c0_i32_0 = arith.constant 0 : i32
    %c0_i32_1 = arith.constant 0 : i32
    return %c0_i32, %c0_i32_0 : i32, i32
  }
  func.func @transform_8(%arg0: i32) -> (i32, i32) {
    %c0_i32 = arith.constant 0 : i32
    %c0_i32_0 = arith.constant 0 : i32
    %c0_i32_1 = arith.constant 0 : i32
    return %c0_i32, %c0_i32_0 : i32, i32
  }
  func.func @transform_9(%arg0: i32) -> (i32, i32) {
    %c0_i32 = arith.constant 0 : i32
    %c0_i32_0 = arith.constant 0 : i32
    return %arg0, %c0_i32 : i32, i32
  }
}

</mosaic_0001>

<llo_original>
// kernel: tpu_custom_call.1
$region0: #{tpu_custom_call.1}
  #allocation0 [shape = 'u32[]', space=smem, size = 0x4, offset = 0x4, fixed_abs, tag = 'smem constant byte address 0x4 - core index']
  #allocation1 [shape = 'u32[144,128]{1,0:T(1,128)}', space=vmem, size = 0x12000, scoped, tag = 'internal scratch']
  %s0 = inlined_call_operand.vmem [shape: f32[8,32], index: 0, kind: input, shape index: {}]
  %s1 = inlined_call_operand.hbm [shape: f32[32,128], index: 1, kind: input, shape index: {}]
  %s2 = inlined_call_operand.vmem [shape: f32[1,128], index: 2, kind: input, shape index: {}]
  %s3 = inlined_call_operand.vmem [shape: f32[128,128], index: 3, kind: input, shape index: {}]
  %s4 = inlined_call_operand.vmem [shape: f32[1,128], index: 4, kind: input, shape index: {}]
  %s5 = inlined_call_operand.hbm [shape: f32[128,128], index: 5, kind: input, shape index: {}]
  %s6 = inlined_call_operand.vmem [shape: f32[1,128], index: 6, kind: input, shape index: {}]
  %s7 = inlined_call_operand.vmem [shape: f32[128,8], index: 7, kind: input, shape index: {}]
  %s8 = inlined_call_operand.vmem [shape: f32[1,8], index: 8, kind: input, shape index: {}]
  %s9 = inlined_call_operand.hbm [shape: f32[8,8], index: 9, kind: output, shape index: {}]
  %s10 = sld [smem:[#allocation0]]
  $region54: #{tpu_custom_call.1} parent=0
    _
  %s12 = ssub.s32 1, %s10
  %s13 = scalar_select 0, %s12, %s10
  $region1: #{tpu_custom_call.1} parent=0
    #allocation2 [shape = 'u8[16384]{0}', space=vmem, size = 0x4000, scoped, tag = 'input window, operand 1, single buffered']
    #allocation3 [shape = 's32[1]{0}', space=sflag, size = 0x4, scoped, tag = 'scoped memory for tpu_custom_call.1']
    #allocation4 [shape = 's32[1]{0}', space=sflag, size = 0x4, scoped, tag = 'scoped memory for tpu_custom_call.1']
    #allocation5 [shape = 'u8[65536]{0}', space=vmem, size = 0x10000, scoped, tag = 'input window, operand 5, single buffered']
    #allocation6 [shape = 's32[1]{0}', space=sflag, size = 0x4, scoped, tag = 'scoped memory for tpu_custom_call.1']
    #allocation7 [shape = 'u8[4096]{0}', space=vmem, size = 0x1000, scoped, tag = 'output window, operand 0, single buffered']
    %14 = vsyncpa [#allocation3], 0
    %15 = vsyncpa [#allocation6], 0
    %16 = vsyncpa [#allocation4], 0
    // Predicated region
    $region2: #{tpu_custom_call.1} parent=1 // pred_check
      _
    $region3: #{tpu_custom_call.1} parent=1 // pred_check_branch
      %18 = sbr.rel (0) target = $region5
    $region4: #{tpu_custom_call.1} parent=1 // pred_region
      _
    $region5: #{tpu_custom_call.1} parent=1 // pred_fallthru
      _
    // Predicated region
    $region6: #{tpu_custom_call.1} parent=1 // pred_check
      _
    $region7: #{tpu_custom_call.1} parent=1 // pred_check_branch
      %20 = sbr.rel (0) target = $region9
    $region8: #{tpu_custom_call.1} parent=1 // pred_region
      %s22 = ssub.s32 512, 512
      %23 = vsyncadd [#allocation3], %s22
      %s24 = sshll.u32 [#allocation2], 4
      %s25 = int_to_ptr.vmem [resolvable:$true] %s24
      %30 = dma.hbm_to_vmem [thread:$0]  %s1, 512, %s25, [#allocation3], 128, 128, 8
    $region9: #{tpu_custom_call.1} parent=1 // pred_fallthru
      _
    // Predicated region
    $region10: #{tpu_custom_call.1} parent=1 // pred_check
      _
    $region11: #{tpu_custom_call.1} parent=1 // pred_check_branch
      %32 = sbr.rel (0) target = $region13
    $region12: #{tpu_custom_call.1} parent=1 // pred_region
      _
    $region13: #{tpu_custom_call.1} parent=1 // pred_fallthru
      _
    // Predicated region
    $region14: #{tpu_custom_call.1} parent=1 // pred_check
      _
    $region15: #{tpu_custom_call.1} parent=1 // pred_check_branch
      %34 = sbr.rel (0) target = $region17
    $region16: #{tpu_custom_call.1} parent=1 // pred_region
      _
    $region17: #{tpu_custom_call.1} parent=1 // pred_fallthru
      _
    // Predicated region
    $region18: #{tpu_custom_call.1} parent=1 // pred_check
      _
    $region19: #{tpu_custom_call.1} parent=1 // pred_check_branch
      %36 = sbr.rel (0) target = $region21
    $region20: #{tpu_custom_call.1} parent=1 // pred_region
      _
    $region21: #{tpu_custom_call.1} parent=1 // pred_fallthru
      _
    // Predicated region
    $region22: #{tpu_custom_call.1} parent=1 // pred_check
      _
    $region23: #{tpu_custom_call.1} parent=1 // pred_check_branch
      %38 = sbr.rel (0) target = $region25
    $region24: #{tpu_custom_call.1} parent=1 // pred_region
      %s40 = ssub.s32 2048, 2048
      %41 = vsyncadd [#allocation6], %s40
      %s42 = sshll.u32 [#allocation5], 4
      %s43 = int_to_ptr.vmem [resolvable:$true] %s42
      %48 = dma.hbm_to_vmem [thread:$0]  %s5, 2048, %s43, [#allocation6], 128, 128, 8
    $region25: #{tpu_custom_call.1} parent=1 // pred_fallthru
      _
    // Predicated region
    $region26: #{tpu_custom_call.1} parent=1 // pred_check
      _
    $region27: #{tpu_custom_call.1} parent=1 // pred_check_branch
      %50 = sbr.rel (0) target = $region29
    $region28: #{tpu_custom_call.1} parent=1 // pred_region
      _
    $region29: #{tpu_custom_call.1} parent=1 // pred_fallthru
      _
    // Predicated region
    $region30: #{tpu_custom_call.1} parent=1 // pred_check
      _
    $region31: #{tpu_custom_call.1} parent=1 // pred_check_branch
      %52 = sbr.rel (0) target = $region33
    $region32: #{tpu_custom_call.1} parent=1 // pred_region
      _
    $region33: #{tpu_custom_call.1} parent=1 // pred_fallthru
      _
    // Predicated region
    $region34: #{tpu_custom_call.1} parent=1 // pred_check
      _
    $region35: #{tpu_custom_call.1} parent=1 // pred_check_branch
      %54 = sbr.rel (0) target = $region37
    $region36: #{tpu_custom_call.1} parent=1 // pred_region
      _
    $region37: #{tpu_custom_call.1} parent=1 // pred_fallthru
      _
    // Predicated region
    $region38: #{tpu_custom_call.1} parent=1 // pred_check
      _
    $region39: #{tpu_custom_call.1} parent=1 // pred_check_branch
      %56 = sbr.rel (0) target = $region41
    $region40: #{tpu_custom_call.1} parent=1 // pred_region
      %57 = dma.done [#allocation3], 512
    $region41: #{tpu_custom_call.1} parent=1 // pred_fallthru
      _
    // Predicated region
    $region42: #{tpu_custom_call.1} parent=1 // pred_check
      _
    $region43: #{tpu_custom_call.1} parent=1 // pred_check_branch
      %59 = sbr.rel (0) target = $region45
    $region44: #{tpu_custom_call.1} parent=1 // pred_region
      %60 = dma.done [#allocation6], 2048
    $region45: #{tpu_custom_call.1} parent=1 // pred_fallthru
      _
    %v61 = vld [vmem:[%s0] sm:$0xff]
    %v62 = vld [vmem:[#allocation2] sm:$0xff]
    %v63 = vld [vmem:[#allocation2 + $0x8] sm:$0xff]
    %v64 = vld [vmem:[#allocation2 + $0x10] sm:$0xff]
    %v65 = vld [vmem:[#allocation2 + $0x18] sm:$0xff]
    %v66 = vld [vmem:[%s2] sm:$0x1]
    %v68 = vlaneseq
    %v69 = vshrl.u32 %v68, 7
    %v70 = vsub.s32 0, %v69
    %v71 = vrot.slane %v66, %v70
    %vm73 = vcmask 261120
    %v75 = vsel %vm73, %v61, 0
    %77 = vmatprep.subr.mxu0 0.0
    %78 = vmatpush1.msra.mxu0 %v62
    %79 = vmatprep.subr.mxu0 0.0
    %80 = vmatpush1.msra.mxu0 %v63
    %81 = vmatprep.subr.mxu0 0.0
    %82 = vmatpush1.msra.mxu0 %v64
    %83 = vmatprep.subr.mxu0 0.0
    %84 = vmatpush1.msra.mxu0 %v65
    %85 = vmatprep.subr.mxu0 0.0
    %86 = vmatpush1.msra.mxu0 0.0
    %87 = vmatprep.subr.mxu0 0.0
    %88 = vmatpush1.msra.mxu0 0.0
    %89 = vmatprep.subr.mxu0 0.0
    %90 = vmatpush1.msra.mxu0 0.0
    %91 = vmatprep.subr.mxu0 0.0
    %92 = vmatpush1.msra.mxu0 0.0
    %93 = vmatprep.subr.mxu0 0.0
    %94 = vmatpush1.msra.mxu0 0.0
    %95 = vmatprep.subr.mxu0 0.0
    %96 = vmatpush1.msra.mxu0 0.0
    %97 = vmatprep.subr.mxu0 0.0
    %98 = vmatpush1.msra.mxu0 0.0
    %99 = vmatprep.subr.mxu0 0.0
    %100 = vmatpush1.msra.mxu0 0.0
    %101 = vmatprep.subr.mxu0 0.0
    %102 = vmatpush1.msra.mxu0 0.0
    %103 = vmatprep.subr.mxu0 0.0
    %104 = vmatpush1.msra.mxu0 0.0
    %105 = vmatprep.subr.mxu0 0.0
    %106 = vmatpush1.msra.mxu0 0.0
    %107 = vmatprep.subr.mxu0 0.0
    %108 = vmatpush1.msra.mxu0 0.0
    %109 = vmatprep.subr.mxu0 0.0
    %110 = vmatpush1.msra.mxu0 0.0
    %111 = vmatprep.subr.mxu0 0.0
    %112 = vmatpush1.msra.mxu0 0.0
    %113 = vmatprep.subr.mxu0 0.0
    %114 = vmatpush1.msra.mxu0 0.0
    %115 = vmatprep.subr.mxu0 0.0
    %116 = vmatpush1.msra.mxu0 0.0
    %117 = vmatprep.subr.mxu0 0.0
    %118 = vmatpush1.msra.mxu0 0.0
    %119 = vmatprep.subr.mxu0 0.0
    %120 = vmatpush1.msra.mxu0 0.0
    %121 = vmatprep.subr.mxu0 0.0
    %122 = vmatpush1.msra.mxu0 0.0
    %123 = vmatprep.subr.mxu0 0.0
    %124 = vmatpush1.msra.mxu0 0.0
    %125 = vmatprep.subr.mxu0 0.0
    %126 = vmatpush1.msra.mxu0 0.0
    %127 = vmatprep.subr.mxu0 0.0
    %128 = vmatpush1.msra.mxu0 0.0
    %129 = vmatprep.subr.mxu0 0.0
    %130 = vmatpush1.msra.mxu0 0.0
    %131 = vmatprep.subr.mxu0 0.0
    %132 = vmatpush1.msra.mxu0 0.0
    %133 = vmatprep.subr.mxu0 0.0
    %134 = vmatpush1.msra.mxu0 0.0
    %135 = vmatprep.subr.mxu0 0.0
    %136 = vmatpush1.msra.mxu0 0.0
    %137 = vmatprep.subr.mxu0 0.0
    %138 = vmatpush1.msra.mxu0 0.0
    %139 = vmatprep.subr.mxu0 0.0
    %140 = vmatpush1.msra.mxu0 0.0
    %141 = vmatprep.mubr.f32.mxu0 0.0
    %142 = vmatmul.mubr.f32.gmra.mrb[0].mxu0 %v75
    %v143 = vpop.f32.mrb[0].mxu0
    %v144 = vadd.f32 %v71, %v143
    %v145 = vpop.f32.mrb[0].mxu0
    %146 = vdwg.mxu0
    %v147 = vmax.f32 %v144, 0.0
    %v148 = vld [vmem:[%s3] sm:$0xff]
    %v149 = vld [vmem:[%s3 + $0x8] sm:$0xff]
    %v150 = vld [vmem:[%s3 + $0x10] sm:$0xff]
    %v151 = vld [vmem:[%s3 + $0x18] sm:$0xff]
    %v152 = vld [vmem:[%s3 + $0x20] sm:$0xff]
    %v153 = vld [vmem:[%s3 + $0x28] sm:$0xff]
    %v154 = vld [vmem:[%s3 + $0x30] sm:$0xff]
    %v155 = vld [vmem:[%s3 + $0x38] sm:$0xff]
    %v156 = vld [vmem:[%s3 + $0x40] sm:$0xff]
    %v157 = vld [vmem:[%s3 + $0x48] sm:$0xff]
    %v158 = vld [vmem:[%s3 + $0x50] sm:$0xff]
    %v159 = vld [vmem:[%s3 + $0x58] sm:$0xff]
    %v160 = vld [vmem:[%s3 + $0x60] sm:$0xff]
    %v161 = vld [vmem:[%s3 + $0x68] sm:$0xff]
    %v162 = vld [vmem:[%s3 + $0x70] sm:$0xff]
    %v163 = vld [vmem:[%s3 + $0x78] sm:$0xff]
    %v164 = vld [vmem:[%s4] sm:$0x1]
    %v166 = vlaneseq
    %v167 = vshrl.u32 %v166, 7
    %v168 = vsub.s32 0, %v167
    %v169 = vrot.slane %v164, %v168
    %171 = vmatprep.subr.mxu0 0.0
    %172 = vmatpush1.msra.mxu0 %v148
    %173 = vmatprep.subr.mxu0 0.0
    %174 = vmatpush1.msra.mxu0 %v149
    %175 = vmatprep.subr.mxu0 0.0
    %176 = vmatpush1.msra.mxu0 %v150
    %177 = vmatprep.subr.mxu0 0.0
    %178 = vmatpush1.msra.mxu0 %v151
    %179 = vmatprep.subr.mxu0 0.0
    %180 = vmatpush1.msra.mxu0 %v152
    %181 = vmatprep.subr.mxu0 0.0
    %182 = vmatpush1.msra.mxu0 %v153
    %183 = vmatprep.subr.mxu0 0.0
    %184 = vmatpush1.msra.mxu0 %v154
    %185 = vmatprep.subr.mxu0 0.0
    %186 = vmatpush1.msra.mxu0 %v155
    %187 = vmatprep.subr.mxu0 0.0
    %188 = vmatpush1.msra.mxu0 %v156
    %189 = vmatprep.subr.mxu0 0.0
    %190 = vmatpush1.msra.mxu0 %v157
    %191 = vmatprep.subr.mxu0 0.0
    %192 = vmatpush1.msra.mxu0 %v158
    %193 = vmatprep.subr.mxu0 0.0
    %194 = vmatpush1.msra.mxu0 %v159
    %195 = vmatprep.subr.mxu0 0.0
    %196 = vmatpush1.msra.mxu0 %v160
    %197 = vmatprep.subr.mxu0 0.0
    %198 = vmatpush1.msra.mxu0 %v161
    %199 = vmatprep.subr.mxu0 0.0
    %200 = vmatpush1.msra.mxu0 %v162
    %201 = vmatprep.subr.mxu0 0.0
    %202 = vmatpush1.msra.mxu0 %v163
    %203 = vmatprep.subr.mxu0 0.0
    %204 = vmatpush1.msra.mxu0 0.0
    %205 = vmatprep.subr.mxu0 0.0
    %206 = vmatpush1.msra.mxu0 0.0
    %207 = vmatprep.subr.mxu0 0.0
    %208 = vmatpush1.msra.mxu0 0.0
    %209 = vmatprep.subr.mxu0 0.0
    %210 = vmatpush1.msra.mxu0 0.0
    %211 = vmatprep.subr.mxu0 0.0
    %212 = vmatpush1.msra.mxu0 0.0
    %213 = vmatprep.subr.mxu0 0.0
    %214 = vmatpush1.msra.mxu0 0.0
    %215 = vmatprep.subr.mxu0 0.0
    %216 = vmatpush1.msra.mxu0 0.0
    %217 = vmatprep.subr.mxu0 0.0
    %218 = vmatpush1.msra.mxu0 0.0
    %219 = vmatprep.subr.mxu0 0.0
    %220 = vmatpush1.msra.mxu0 0.0
    %221 = vmatprep.subr.mxu0 0.0
    %222 = vmatpush1.msra.mxu0 0.0
    %223 = vmatprep.subr.mxu0 0.0
    %224 = vmatpush1.msra.mxu0 0.0
    %225 = vmatprep.subr.mxu0 0.0
    %226 = vmatpush1.msra.mxu0 0.0
    %227 = vmatprep.subr.mxu0 0.0
    %228 = vmatpush1.msra.mxu0 0.0
    %229 = vmatprep.subr.mxu0 0.0
    %230 = vmatpush1.msra.mxu0 0.0
    %231 = vmatprep.subr.mxu0 0.0
    %232 = vmatpush1.msra.mxu0 0.0
    %233 = vmatprep.subr.mxu0 0.0
    %234 = vmatpush1.msra.mxu0 0.0
    %235 = vmatprep.mubr.f32.mxu0 0.0
    %236 = vmatmul.mubr.f32.gmra.mrb[0].mxu0 %v147
    %v237 = vpop.f32.mrb[0].mxu0
    %v238 = vadd.f32 %v169, %v237
    %v239 = vpop.f32.mrb[0].mxu0
    %240 = vdwg.mxu0
    %v241 = vmax.f32 %v238, 0.0
    %v242 = vld [vmem:[#allocation5] sm:$0xff]
    %v243 = vld [vmem:[#allocation5 + $0x8] sm:$0xff]
    %v244 = vld [vmem:[#allocation5 + $0x10] sm:$0xff]
    %v245 = vld [vmem:[#allocation5 + $0x18] sm:$0xff]
    %v246 = vld [vmem:[#allocation5 + $0x20] sm:$0xff]
    %v247 = vld [vmem:[#allocation5 + $0x28] sm:$0xff]
    %v248 = vld [vmem:[#allocation5 + $0x30] sm:$0xff]
    %v249 = vld [vmem:[#allocation5 + $0x38] sm:$0xff]
    %v250 = vld [vmem:[#allocation5 + $0x40] sm:$0xff]
    %v251 = vld [vmem:[#allocation5 + $0x48] sm:$0xff]
    %v252 = vld [vmem:[#allocation5 + $0x50] sm:$0xff]
    %v253 = vld [vmem:[#allocation5 + $0x58] sm:$0xff]
    %v254 = vld [vmem:[#allocation5 + $0x60] sm:$0xff]
    %v255 = vld [vmem:[#allocation5 + $0x68] sm:$0xff]
    %v256 = vld [vmem:[#allocation5 + $0x70] sm:$0xff]
    %v257 = vld [vmem:[#allocation5 + $0x78] sm:$0xff]
    %v258 = vld [vmem:[%s6] sm:$0x1]
    %v260 = vlaneseq
    %v261 = vshrl.u32 %v260, 7
    %v262 = vsub.s32 0, %v261
    %v263 = vrot.slane %v258, %v262
    %265 = vmatprep.subr.mxu0 0.0
    %266 = vmatpush1.msra.mxu0 %v242
    %267 = vmatprep.subr.mxu0 0.0
    %268 = vmatpush1.msra.mxu0 %v243
    %269 = vmatprep.subr.mxu0 0.0
    %270 = vmatpush1.msra.mxu0 %v244
    %271 = vmatprep.subr.mxu0 0.0
    %272 = vmatpush1.msra.mxu0 %v245
    %273 = vmatprep.subr.mxu0 0.0
    %274 = vmatpush1.msra.mxu0 %v246
    %275 = vmatprep.subr.mxu0 0.0
    %276 = vmatpush1.msra.mxu0 %v247
    %277 = vmatprep.subr.mxu0 0.0
    %278 = vmatpush1.msra.mxu0 %v248
    %279 = vmatprep.subr.mxu0 0.0
    %280 = vmatpush1.msra.mxu0 %v249
    %281 = vmatprep.subr.mxu0 0.0
    %282 = vmatpush1.msra.mxu0 %v250
    %283 = vmatprep.subr.mxu0 0.0
    %284 = vmatpush1.msra.mxu0 %v251
    %285 = vmatprep.subr.mxu0 0.0
    %286 = vmatpush1.msra.mxu0 %v252
    %287 = vmatprep.subr.mxu0 0.0
    %288 = vmatpush1.msra.mxu0 %v253
    %289 = vmatprep.subr.mxu0 0.0
    %290 = vmatpush1.msra.mxu0 %v254
    %291 = vmatprep.subr.mxu0 0.0
    %292 = vmatpush1.msra.mxu0 %v255
    %293 = vmatprep.subr.mxu0 0.0
    %294 = vmatpush1.msra.mxu0 %v256
    %295 = vmatprep.subr.mxu0 0.0
    %296 = vmatpush1.msra.mxu0 %v257
    %297 = vmatprep.subr.mxu0 0.0
    %298 = vmatpush1.msra.mxu0 0.0
    %299 = vmatprep.subr.mxu0 0.0
    %300 = vmatpush1.msra.mxu0 0.0
    %301 = vmatprep.subr.mxu0 0.0
    %302 = vmatpush1.msra.mxu0 0.0
    %303 = vmatprep.subr.mxu0 0.0
    %304 = vmatpush1.msra.mxu0 0.0
    %305 = vmatprep.subr.mxu0 0.0
    %306 = vmatpush1.msra.mxu0 0.0
    %307 = vmatprep.subr.mxu0 0.0
    %308 = vmatpush1.msra.mxu0 0.0
    %309 = vmatprep.subr.mxu0 0.0
    %310 = vmatpush1.msra.mxu0 0.0
    %311 = vmatprep.subr.mxu0 0.0
    %312 = vmatpush1.msra.mxu0 0.0
    %313 = vmatprep.subr.mxu0 0.0
    %314 = vmatpush1.msra.mxu0 0.0
    %315 = vmatprep.subr.mxu0 0.0
    %316 = vmatpush1.msra.mxu0 0.0
    %317 = vmatprep.subr.mxu0 0.0
    %318 = vmatpush1.msra.mxu0 0.0
    %319 = vmatprep.subr.mxu0 0.0
    %320 = vmatpush1.msra.mxu0 0.0
    %321 = vmatprep.subr.mxu0 0.0
    %322 = vmatpush1.msra.mxu0 0.0
    %323 = vmatprep.subr.mxu0 0.0
    %324 = vmatpush1.msra.mxu0 0.0
    %325 = vmatprep.subr.mxu0 0.0
    %326 = vmatpush1.msra.mxu0 0.0
    %327 = vmatprep.subr.mxu0 0.0
    %328 = vmatpush1.msra.mxu0 0.0
    %329 = vmatprep.mubr.f32.mxu0 0.0
    %330 = vmatmul.mubr.f32.gmra.mrb[0].mxu0 %v241
    %v331 = vpop.f32.mrb[0].mxu0
    %v332 = vadd.f32 %v263, %v331
    %v333 = vpop.f32.mrb[0].mxu0
    %334 = vdwg.mxu0
    %v335 = vmax.f32 %v332, 0.0
    %v336 = vld [vmem:[%s7] sm:$0xff]
    %v337 = vld [vmem:[%s7 + $0x8] sm:$0xff]
    %v338 = vld [vmem:[%s7 + $0x10] sm:$0xff]
    %v339 = vld [vmem:[%s7 + $0x18] sm:$0xff]
    %v340 = vld [vmem:[%s7 + $0x20] sm:$0xff]
    %v341 = vld [vmem:[%s7 + $0x28] sm:$0xff]
    %v342 = vld [vmem:[%s7 + $0x30] sm:$0xff]
    %v343 = vld [vmem:[%s7 + $0x38] sm:$0xff]
    %v344 = vld [vmem:[%s7 + $0x40] sm:$0xff]
    %v345 = vld [vmem:[%s7 + $0x48] sm:$0xff]
    %v346 = vld [vmem:[%s7 + $0x50] sm:$0xff]
    %v347 = vld [vmem:[%s7 + $0x58] sm:$0xff]
    %v348 = vld [vmem:[%s7 + $0x60] sm:$0xff]
    %v349 = vld [vmem:[%s7 + $0x68] sm:$0xff]
    %v350 = vld [vmem:[%s7 + $0x70] sm:$0xff]
    %v351 = vld [vmem:[%s7 + $0x78] sm:$0xff]
    %v352 = vld [vmem:[%s8] sm:$0x1]
    %v354 = vlaneseq
    %v355 = vshrl.u32 %v354, 7
    %v356 = vsub.s32 0, %v355
    %v357 = vrot.slane %v352, %v356
    %359 = vmatprep.subr.mxu0 0.0
    %360 = vmatpush1.msra.mxu0 %v336
    %361 = vmatprep.subr.mxu0 0.0
    %362 = vmatpush1.msra.mxu0 %v337
    %363 = vmatprep.subr.mxu0 0.0
    %364 = vmatpush1.msra.mxu0 %v338
    %365 = vmatprep.subr.mxu0 0.0
    %366 = vmatpush1.msra.mxu0 %v339
    %367 = vmatprep.subr.mxu0 0.0
    %368 = vmatpush1.msra.mxu0 %v340
    %369 = vmatprep.subr.mxu0 0.0
    %370 = vmatpush1.msra.mxu0 %v341
    %371 = vmatprep.subr.mxu0 0.0
    %372 = vmatpush1.msra.mxu0 %v342
    %373 = vmatprep.subr.mxu0 0.0
    %374 = vmatpush1.msra.mxu0 %v343
    %375 = vmatprep.subr.mxu0 0.0
    %376 = vmatpush1.msra.mxu0 %v344
    %377 = vmatprep.subr.mxu0 0.0
    %378 = vmatpush1.msra.mxu0 %v345
    %379 = vmatprep.subr.mxu0 0.0
    %380 = vmatpush1.msra.mxu0 %v346
    %381 = vmatprep.subr.mxu0 0.0
    %382 = vmatpush1.msra.mxu0 %v347
    %383 = vmatprep.subr.mxu0 0.0
    %384 = vmatpush1.msra.mxu0 %v348
    %385 = vmatprep.subr.mxu0 0.0
    %386 = vmatpush1.msra.mxu0 %v349
    %387 = vmatprep.subr.mxu0 0.0
    %388 = vmatpush1.msra.mxu0 %v350
    %389 = vmatprep.subr.mxu0 0.0
    %390 = vmatpush1.msra.mxu0 %v351
    %391 = vmatprep.subr.mxu0 0.0
    %392 = vmatpush1.msra.mxu0 0.0
    %393 = vmatprep.subr.mxu0 0.0
    %394 = vmatpush1.msra.mxu0 0.0
    %395 = vmatprep.subr.mxu0 0.0
    %396 = vmatpush1.msra.mxu0 0.0
    %397 = vmatprep.subr.mxu0 0.0
    %398 = vmatpush1.msra.mxu0 0.0
    %399 = vmatprep.subr.mxu0 0.0
    %400 = vmatpush1.msra.mxu0 0.0
    %401 = vmatprep.subr.mxu0 0.0
    %402 = vmatpush1.msra.mxu0 0.0
    %403 = vmatprep.subr.mxu0 0.0
    %404 = vmatpush1.msra.mxu0 0.0
    %405 = vmatprep.subr.mxu0 0.0
    %406 = vmatpush1.msra.mxu0 0.0
    %407 = vmatprep.subr.mxu0 0.0
    %408 = vmatpush1.msra.mxu0 0.0
    %409 = vmatprep.subr.mxu0 0.0
    %410 = vmatpush1.msra.mxu0 0.0
    %411 = vmatprep.subr.mxu0 0.0
    %412 = vmatpush1.msra.mxu0 0.0
    %413 = vmatprep.subr.mxu0 0.0
    %414 = vmatpush1.msra.mxu0 0.0
    %415 = vmatprep.subr.mxu0 0.0
    %416 = vmatpush1.msra.mxu0 0.0
    %417 = vmatprep.subr.mxu0 0.0
    %418 = vmatpush1.msra.mxu0 0.0
    %419 = vmatprep.subr.mxu0 0.0
    %420 = vmatpush1.msra.mxu0 0.0
    %421 = vmatprep.subr.mxu0 0.0
    %422 = vmatpush1.msra.mxu0 0.0
    %423 = vmatprep.mubr.f32.mxu0 0.0
    %424 = vmatmul.mubr.f32.gmra.mrb[0].mxu0 %v335
    %v425 = vpop.f32.mrb[0].mxu0
    %v426 = vadd.f32 %v357, %v425
    %v427 = vpop.f32.mrb[0].mxu0
    %428 = vdwg.mxu0
    %vm429 = vcmask 64512
    %430 = vst.msk [vmem:[#allocation7] sm:$0xff] %vm429, %v426
    // Predicated region
    $region46: #{tpu_custom_call.1} parent=1 // pred_check
      _
    $region47: #{tpu_custom_call.1} parent=1 // pred_check_branch
      %432 = sbr.rel (0) target = $region49
    $region48: #{tpu_custom_call.1} parent=1 // pred_region
      %s434 = ssub.s32 128, 128
      %435 = vsyncadd [#allocation4], %s434
      %s437 = sshll.u32 [#allocation7], 4
      %s438 = int_to_ptr.vmem [resolvable:$true] %s437
      %440 = dma.vmem_to_hbm [thread:$0]  %s438, 128, %s9, [#allocation4]
    $region49: #{tpu_custom_call.1} parent=1 // pred_fallthru
      _
    // Predicated region
    $region50: #{tpu_custom_call.1} parent=1 // pred_check
      _
    $region51: #{tpu_custom_call.1} parent=1 // pred_check_branch
      %442 = sbr.rel (0) target = $region53
    $region52: #{tpu_custom_call.1} parent=1 // pred_region
      %443 = dma.done [#allocation4], 128
    $region53: #{tpu_custom_call.1} parent=1 // pred_fallthru
      _
    %444 = vsyncpa [#allocation3], 1
    %445 = vsyncpa [#allocation6], 1
    %446 = vsyncpa [#allocation4], 1

</llo_original>
